<compile_context>
chip_gen: v7x
topology: tpu7x:2x2x1
jax: 0.10.0
libtpu: 0.0.40
codegen_flags: <defaults>
</compile_context>

<pallas_src>
import math

import jax
import jax.numpy as jnp
from jax.experimental import pallas as pl
from jax.experimental.pallas import tpu as pltpu


# ---------------------------------------------------------------------------
# Parameter construction (matches PyTorch init: xavier_uniform weights, zero bias)
# ---------------------------------------------------------------------------
def _xavier_uniform(key, fan_in, fan_out, dtype=jnp.float32):
    # torch.nn.init.xavier_uniform_ (gain=1.0) on a (out, in) weight, returned
    # transposed to (in, out) as used by the kernel (y = x @ W_t + b).
    bound = math.sqrt(6.0 / (fan_in + fan_out))
    w = jax.random.uniform(key, (fan_out, fan_in), dtype=dtype,
                           minval=-bound, maxval=bound)
    return w.T


def make_params(key, nhid):
    """Logical (unpadded) f32 params: list of ((in,out) weight, (out,) bias)."""
    dims = [nhid * 2 * 4, nhid * 2, nhid, nhid // 2, 1]
    keys = jax.random.split(key, 4)
    params = []
    for i in range(4):
        fan_in, fan_out = dims[i], dims[i + 1]
        w = _xavier_uniform(keys[i], fan_in, fan_out)        # (in, out)
        b = jnp.zeros((fan_out,), dtype=jnp.float32)         # zeros_ init
        params.append((w, b))
    return params


def _round_up(x, m):
    return (x + m - 1) // m * m


def _pad2(w, rows, cols):
    out = jnp.zeros((rows, cols), w.dtype)
    return out.at[: w.shape[0], : w.shape[1]].set(w)


def pad_params_for_kernel(params):
    """Zero-pad hidden widths to multiples of 128, cast weights to bf16.

    Returns (w0, b0, w1, b1, w2, b2, w3_col, b3_scalar) ready for the kernel.
    """
    (w0, b0), (w1, b1), (w2, b2), (w3, b3) = params
    d_in = w0.shape[0]
    h0 = _round_up(w0.shape[1], 128)
    h1 = _round_up(w1.shape[1], 128)
    h2 = _round_up(w2.shape[1], 128)

    w0p = _pad2(w0, d_in, h0).astype(jnp.bfloat16)
    w1p = _pad2(w1, h0, h1).astype(jnp.bfloat16)
    w2p = _pad2(w2, h1, h2).astype(jnp.bfloat16)
    # lin3 weight kept as a single (h2, 1) column so the last layer is a plain
    # h @ w3 matmul (no activation transpose needed).
    w3p = _pad2(w3, h2, 1).astype(jnp.bfloat16)

    b0p = _pad2(b0.reshape(1, -1), 1, h0).astype(jnp.float32)
    b1p = _pad2(b1.reshape(1, -1), 1, h1).astype(jnp.float32)
    b2p = _pad2(b2.reshape(1, -1), 1, h2).astype(jnp.float32)
    b3p = b3.reshape(1).astype(jnp.float32)                  # scalar, lives in SMEM
    return (w0p, b0p, w1p, b1p, w2p, b2p, w3p, b3p)


# ---------------------------------------------------------------------------
# Kernel
# ---------------------------------------------------------------------------
def mlp_kernel(x_ref,
               w0_ref, b0_ref,
               w1_ref, b1_ref,
               w2_ref, b2_ref,
               w3_ref, b3_ref,
               o_ref):
    """Fused 4-layer MLP on one (TB, d_in) batch tile.

    x streamed f32 and cast to bf16 in-kernel (VPU cast hides under DMA/MXU);
    bf16 matmul inputs, f32 accumulation; bias add / ReLU in f32 (v5e-safe);
    hidden widths padded to 128 so intermediates are lane-dense.
    """
    f32 = jnp.float32
    bf16 = jnp.bfloat16

    x = x_ref[...].astype(bf16)                              # in-kernel cast

    h = jnp.dot(x, w0_ref[...], preferred_element_type=f32) + b0_ref[...]
    h = jnp.maximum(h, 0.0).astype(bf16)                     # relu(lin0)

    h = jnp.dot(h, w1_ref[...], preferred_element_type=f32) + b1_ref[...]
    h = jnp.maximum(h, 0.0).astype(bf16)                     # relu(lin1)

    h = jnp.dot(h, w2_ref[...], preferred_element_type=f32) + b2_ref[...]
    h = jnp.maximum(h, 0.0).astype(bf16)                     # relu(lin2)

    # lin3: (TB, H) @ (H, 1) -> (TB, 1); tiny output, masked store is fine.
    y = jnp.dot(h, w3_ref[...], preferred_element_type=f32)
    o_ref[...] = y + b3_ref[0]


# ---------------------------------------------------------------------------
# Wrapper
# ---------------------------------------------------------------------------
def _choose_tb(B, *, tb_max=4096, min_steps=2):
    """Pick a batch tile: big enough to amortize per-step overhead, small
    enough that the grid has >= min_steps steps (v7x megacore) when B allows."""
    tb = _round_up(pl.cdiv(B, min_steps), 128)
    return max(128, min(tb, tb_max))


def mlp_forward(x, kernel_params, *, tb=None, training=False):
    """x: (B, nhid*2*4) float32.  Returns (B,) float32, matching .view(-1)."""
    assert not training, "training-mode dropout not implemented (inference only)"
    # TODO(synk): training-mode dropout (pltpu.prng_seed + stateful_bernoulli).

    w0, b0, w1, b1, w2, b2, w3, b3 = kernel_params
    B, d_in = x.shape
    assert d_in == w0.shape[0], (d_in, w0.shape)

    h0 = w0.shape[1]
    h1 = w1.shape[1]
    h2 = w2.shape[1]

    if tb is None:
        tb = _choose_tb(B)
    assert tb % 8 == 0, "tb must be a multiple of 8 (sublane alignment)"

    grid = (pl.cdiv(B, tb),)                                  # ragged last block OK

    # Advisory cost hint so XLA schedules/overlaps the call sensibly.
    flops = 2 * B * (d_in * h0 + h0 * h1 + h1 * h2 + h2 * 1)
    bytes_accessed = (B * d_in * 4                            # x, f32, read once
                      + (d_in * h0 + h0 * h1 + h1 * h2 + h2) * 2   # bf16 weights
                      + (h0 + h1 + h2 + 1) * 4                # f32 biases
                      + B * 4)                                # f32 output
    cost = pl.CostEstimate(flops=flops, transcendentals=0,
                           bytes_accessed=bytes_accessed)

    out = pl.pallas_call(
        mlp_kernel,
        out_shape=jax.ShapeDtypeStruct((B, 1), jnp.float32),
        grid=grid,
        in_specs=[
            # Streamed f32 batch tile (double-buffered by the pipeline).
            pl.BlockSpec((tb, d_in), lambda i: (i, 0)),
            # Weights / biases: same block every step -> VMEM-resident.
            pl.BlockSpec((d_in, h0), lambda i: (0, 0)),
            pl.BlockSpec((1, h0), lambda i: (0, 0)),
            pl.BlockSpec((h0, h1), lambda i: (0, 0)),
            pl.BlockSpec((1, h1), lambda i: (0, 0)),
            pl.BlockSpec((h1, h2), lambda i: (0, 0)),
            pl.BlockSpec((1, h2), lambda i: (0, 0)),
            pl.BlockSpec((h2, 1), lambda i: (0, 0)),
            # Scalar lin3 bias in SMEM.
            pl.BlockSpec(memory_space=pltpu.MemorySpace.SMEM),
        ],
        out_specs=pl.BlockSpec((tb, 1), lambda i: (i, 0)),
        compiler_params=pltpu.CompilerParams(
            dimension_semantics=("parallel",),        # megacore split on v7x
            vmem_limit_bytes=32 * 1024 * 1024,        # fits v7x's 64 MiB budget
        ),
        cost_estimate=cost,
    )(x, w0, b0, w1, b1, w2, b2, w3, b3)

    return out.reshape(-1)


# ---------------------------------------------------------------------------
# Pure-JAX reference (same bf16/f32 mixed precision as the kernel)
# ---------------------------------------------------------------------------
def mlp_reference(x, params):
    (w0, b0), (w1, b1), (w2, b2), (w3, b3) = params
    h = x.astype(jnp.bfloat16)
    for w, b in ((w0, b0), (w1, b1), (w2, b2)):
        h = jnp.dot(h, w.astype(jnp.bfloat16),
                    preferred_element_type=jnp.float32) + b
        h = jnp.maximum(h, 0.0).astype(jnp.bfloat16)
    y = jnp.dot(h, w3.astype(jnp.bfloat16),
                preferred_element_type=jnp.float32) + b3
    return y.reshape(-1)


if __name__ == "__main__":
    nhid = 32            # conf.model.nhid
    batch = 8

    root = jax.random.PRNGKey(0)
    k_x, k_p, k_x2 = jax.random.split(root, 3)

    # Input "scores" has feature dim nhid*2*4 = 256.
    x = jax.random.normal(k_x, (batch, nhid * 2 * 4), dtype=jnp.float32)
    params = make_params(k_p, nhid)
    kparams = pad_params_for_kernel(params)

    # Small batch: single (ragged, masked) grid step.
    out = jax.block_until_ready(mlp_forward(x, kparams))
    ref = mlp_reference(x, params)
    assert out.shape == (batch,), out.shape
    assert out.dtype == jnp.float32
    assert jnp.allclose(out, ref, atol=2e-2, rtol=2e-2), (out, ref)

    # Larger batch: auto tb=512 -> grid of 2 "parallel" steps with a ragged,
    # masked last block (no batch padding, no wrapper-side bf16 copy).
    x2 = jax.random.normal(k_x2, (1000, nhid * 2 * 4), dtype=jnp.float32)
    out2 = jax.block_until_ready(mlp_forward(x2, kparams))
    ref2 = mlp_reference(x2, params)
    assert out2.shape == (1000,), out2.shape
    assert jnp.allclose(out2, ref2, atol=2e-2, rtol=2e-2)

    print("KERNEL_OK")
</pallas_src>

<mosaic_0001>
module attributes {stable_mosaic.version = 11 : i64} {
  func.func @mlp_kernel(%arg0: i32, %arg1: memref<128x256xf32, #tpu.memory_space<vmem>>, %arg2: memref<256x128xbf16, #tpu.memory_space<vmem>>, %arg3: memref<1x128xf32, #tpu.memory_space<vmem>>, %arg4: memref<128x128xbf16, #tpu.memory_space<vmem>>, %arg5: memref<1x128xf32, #tpu.memory_space<vmem>>, %arg6: memref<128x128xbf16, #tpu.memory_space<vmem>>, %arg7: memref<1x128xf32, #tpu.memory_space<vmem>>, %arg8: memref<128x1xbf16, #tpu.memory_space<vmem>>, %arg9: memref<1xf32, #tpu.memory_space<smem>>, %arg10: memref<128x1xf32, #tpu.memory_space<vmem>>) attributes {dimension_semantics = [#tpu.dimension_semantics<parallel>], iteration_bounds = array<i64: 1>, scalar_prefetch = 0 : i64, scratch_operands = 0 : i64, tpu.core_type = #tpu.core_type<tc>, window_params = [{transform_indices = @transform_0, window_bounds = array<i64: 128, 256>}, {pipeline_mode = #tpu.pipeline_mode<synchronous>, transform_indices = @transform_1, window_bounds = array<i64: 256, 128>}, {pipeline_mode = #tpu.pipeline_mode<synchronous>, transform_indices = @transform_2, window_bounds = array<i64: 1, 128>}, {pipeline_mode = #tpu.pipeline_mode<synchronous>, transform_indices = @transform_3, window_bounds = array<i64: 128, 128>}, {pipeline_mode = #tpu.pipeline_mode<synchronous>, transform_indices = @transform_4, window_bounds = array<i64: 1, 128>}, {pipeline_mode = #tpu.pipeline_mode<synchronous>, transform_indices = @transform_5, window_bounds = array<i64: 128, 128>}, {pipeline_mode = #tpu.pipeline_mode<synchronous>, transform_indices = @transform_6, window_bounds = array<i64: 1, 128>}, {pipeline_mode = #tpu.pipeline_mode<synchronous>, transform_indices = @transform_7, window_bounds = array<i64: 128, 1>}, {transform_indices = @transform_8, window_bounds = array<i64: 1>}, {transform_indices = @transform_9, window_bounds = array<i64: 128, 1>}]} {
    %c0 = arith.constant 0 : index
    %c0_0 = arith.constant 0 : index
    %0 = vector.load %arg1[%c0, %c0_0] : memref<128x256xf32, #tpu.memory_space<vmem>>, vector<128x256xf32>
    %1 = arith.truncf %0 : vector<128x256xf32> to vector<128x256xbf16>
    %c0_1 = arith.constant 0 : index
    %c0_2 = arith.constant 0 : index
    %2 = vector.load %arg2[%c0_1, %c0_2] : memref<256x128xbf16, #tpu.memory_space<vmem>>, vector<256x128xbf16>
    %cst = arith.constant dense<0.000000e+00> : vector<128x128xf32>
    %3 = tpu.matmul %1, %2, %cst {dimension_numbers = #tpu.dot_dimension_numbers<[1], [0], [0], [1], [0, 0, 1, 1], [], []>} : vector<128x256xbf16>, vector<256x128xbf16>, vector<128x128xf32> -> vector<128x128xf32>
    %c0_3 = arith.constant 0 : index
    %c0_4 = arith.constant 0 : index
    %4 = vector.load %arg3[%c0_3, %c0_4] : memref<1x128xf32, #tpu.memory_space<vmem>>, vector<1x128xf32>
    %5 = vector.broadcast %4 : vector<1x128xf32> to vector<128x128xf32>
    %6 = arith.addf %3, %5 : vector<128x128xf32>
    %cst_5 = arith.constant 0.000000e+00 : f32
    %7 = vector.broadcast %cst_5 : f32 to vector<128x128xf32>
    %8 = arith.maximumf %6, %7 : vector<128x128xf32>
    %9 = arith.truncf %8 : vector<128x128xf32> to vector<128x128xbf16>
    %c0_6 = arith.constant 0 : index
    %c0_7 = arith.constant 0 : index
    %10 = vector.load %arg4[%c0_6, %c0_7] : memref<128x128xbf16, #tpu.memory_space<vmem>>, vector<128x128xbf16>
    %cst_8 = arith.constant dense<0.000000e+00> : vector<128x128xf32>
    %11 = tpu.matmul %9, %10, %cst_8 {dimension_numbers = #tpu.dot_dimension_numbers<[1], [0], [0], [1], [0, 0, 1, 1], [], []>} : vector<128x128xbf16>, vector<128x128xbf16>, vector<128x128xf32> -> vector<128x128xf32>
    %c0_9 = arith.constant 0 : index
    %c0_10 = arith.constant 0 : index
    %12 = vector.load %arg5[%c0_9, %c0_10] : memref<1x128xf32, #tpu.memory_space<vmem>>, vector<1x128xf32>
    %13 = vector.broadcast %12 : vector<1x128xf32> to vector<128x128xf32>
    %14 = arith.addf %11, %13 : vector<128x128xf32>
    %cst_11 = arith.constant 0.000000e+00 : f32
    %15 = vector.broadcast %cst_11 : f32 to vector<128x128xf32>
    %16 = arith.maximumf %14, %15 : vector<128x128xf32>
    %17 = arith.truncf %16 : vector<128x128xf32> to vector<128x128xbf16>
    %c0_12 = arith.constant 0 : index
    %c0_13 = arith.constant 0 : index
    %18 = vector.load %arg6[%c0_12, %c0_13] : memref<128x128xbf16, #tpu.memory_space<vmem>>, vector<128x128xbf16>
    %cst_14 = arith.constant dense<0.000000e+00> : vector<128x128xf32>
    %19 = tpu.matmul %17, %18, %cst_14 {dimension_numbers = #tpu.dot_dimension_numbers<[1], [0], [0], [1], [0, 0, 1, 1], [], []>} : vector<128x128xbf16>, vector<128x128xbf16>, vector<128x128xf32> -> vector<128x128xf32>
    %c0_15 = arith.constant 0 : index
    %c0_16 = arith.constant 0 : index
    %20 = vector.load %arg7[%c0_15, %c0_16] : memref<1x128xf32, #tpu.memory_space<vmem>>, vector<1x128xf32>
    %21 = vector.broadcast %20 : vector<1x128xf32> to vector<128x128xf32>
    %22 = arith.addf %19, %21 : vector<128x128xf32>
    %cst_17 = arith.constant 0.000000e+00 : f32
    %23 = vector.broadcast %cst_17 : f32 to vector<128x128xf32>
    %24 = arith.maximumf %22, %23 : vector<128x128xf32>
    %25 = arith.truncf %24 : vector<128x128xf32> to vector<128x128xbf16>
    %c0_18 = arith.constant 0 : index
    %c0_19 = arith.constant 0 : index
    %26 = vector.load %arg8[%c0_18, %c0_19] : memref<128x1xbf16, #tpu.memory_space<vmem>>, vector<128x1xbf16>
    %cst_20 = arith.constant dense<0.000000e+00> : vector<128x1xf32>
    %27 = tpu.matmul %25, %26, %cst_20 {dimension_numbers = #tpu.dot_dimension_numbers<[1], [0], [0], [1], [0, 0, 1, 1], [], []>} : vector<128x128xbf16>, vector<128x1xbf16>, vector<128x1xf32> -> vector<128x1xf32>
    %c0_21 = arith.constant 0 : index
    %28 = memref.load %arg9[%c0_21] : memref<1xf32, #tpu.memory_space<smem>>
    %29 = vector.broadcast %28 : f32 to vector<128x1xf32>
    %30 = arith.addf %27, %29 : vector<128x1xf32>
    %c0_22 = arith.constant 0 : index
    %c0_23 = arith.constant 0 : index
    %31 = vector.load %arg10[%c0_22, %c0_23] : memref<128x1xf32, #tpu.memory_space<vmem>>, vector<128x1xf32>
    tpu.vector_store %arg10[%c0_22, %c0_23], %30 {strides = array<i32>} : memref<128x1xf32, #tpu.memory_space<vmem>>, vector<128x1xf32>,
    return
  }
  func.func @transform_0(%arg0: i32) -> (i32, i32) {
    %c0_i32 = arith.constant 0 : i32
    %c0_i32_0 = arith.constant 0 : i32
    return %arg0, %c0_i32 : i32, i32
  }
  func.func @transform_1(%arg0: i32) -> (i32, i32) {
    %c0_i32 = arith.constant 0 : i32
    %c0_i32_0 = arith.constant 0 : i32
    %c0_i32_1 = arith.constant 0 : i32
    return %c0_i32, %c0_i32_0 : i32, i32
  }
  func.func @transform_2(%arg0: i32) -> (i32, i32) {
    %c0_i32 = arith.constant 0 : i32
    %c0_i32_0 = arith.constant 0 : i32
    %c0_i32_1 = arith.constant 0 : i32
    return %c0_i32, %c0_i32_0 : i32, i32
  }
  func.func @transform_3(%arg0: i32) -> (i32, i32) {
    %c0_i32 = arith.constant 0 : i32
    %c0_i32_0 = arith.constant 0 : i32
    %c0_i32_1 = arith.constant 0 : i32
    return %c0_i32, %c0_i32_0 : i32, i32
  }
  func.func @transform_4(%arg0: i32) -> (i32, i32) {
    %c0_i32 = arith.constant 0 : i32
    %c0_i32_0 = arith.constant 0 : i32
    %c0_i32_1 = arith.constant 0 : i32
    return %c0_i32, %c0_i32_0 : i32, i32
  }
  func.func @transform_5(%arg0: i32) -> (i32, i32) {
    %c0_i32 = arith.constant 0 : i32
    %c0_i32_0 = arith.constant 0 : i32
    %c0_i32_1 = arith.constant 0 : i32
    return %c0_i32, %c0_i32_0 : i32, i32
  }
  func.func @transform_6(%arg0: i32) -> (i32, i32) {
    %c0_i32 = arith.constant 0 : i32
    %c0_i32_0 = arith.constant 0 : i32
    %c0_i32_1 = arith.constant 0 : i32
    return %c0_i32, %c0_i32_0 : i32, i32
  }
  func.func @transform_7(%arg0: i32) -> (i32, i32) {
    %c0_i32 = arith.constant 0 : i32
    %c0_i32_0 = arith.constant 0 : i32
    %c0_i32_1 = arith.constant 0 : i32
    return %c0_i32, %c0_i32_0 : i32, i32
  }
  func.func @transform_8(%arg0: i32) -> i32 {
    %c0_i32 = arith.constant 0 : i32
    %c0_i32_0 = arith.constant 0 : i32
    return %c0_i32 : i32
  }
  func.func @transform_9(%arg0: i32) -> (i32, i32) {
    %c0_i32 = arith.constant 0 : i32
    %c0_i32_0 = arith.constant 0 : i32
    return %arg0, %c0_i32 : i32, i32
  }
}

</mosaic_0001>

<llo_original>
// kernel: tpu_custom_call.1
$region0: #{tpu_custom_call.1}
  #allocation0 [shape = 'u32[]', space=smem, size = 0x4, offset = 0x4, fixed_abs, tag = 'smem constant byte address 0x4 - core index']
  #allocation1 [shape = 'u32[144,128]{1,0:T(1,128)}', space=vmem, size = 0x12000, scoped, tag = 'internal scratch']
  #allocation2 [shape = 'f32[1]{0:T(128)S(6)}', space=smem, size = 0x200, scoped, tag = 'scoped memory for tpu_custom_call.1']
  %s0 = inlined_call_operand.vmem [shape: f32[8,256], index: 0, kind: input, shape index: {}]
  %s1 = inlined_call_operand.hbm [shape: bf16[256,128], index: 1, kind: input, shape index: {}]
  %s2 = inlined_call_operand.hbm [shape: f32[1,128], index: 2, kind: input, shape index: {}]
  %s3 = inlined_call_operand.vmem [shape: bf16[128,128], index: 3, kind: input, shape index: {}]
  %s4 = inlined_call_operand.vmem [shape: f32[1,128], index: 4, kind: input, shape index: {}]
  %s5 = inlined_call_operand.hbm [shape: bf16[128,128], index: 5, kind: input, shape index: {}]
  %s6 = inlined_call_operand.vmem [shape: f32[1,128], index: 6, kind: input, shape index: {}]
  %s7 = inlined_call_operand.vmem [shape: bf16[128,1], index: 7, kind: input, shape index: {}]
  %s8 = inlined_call_operand.<no memory space> [shape: f32[1], index: 8, kind: input, shape index: {}]
  %s9 = inlined_call_operand.vmem [shape: f32[8,1], index: 9, kind: output, shape index: {}]
  %s10 = sld [smem:[#allocation0]]
  $region92: #{tpu_custom_call.1} parent=0
    _
  %s12 = ssub.s32 1, %s10
  %s13 = scalar_select 0, %s12, %s10
  %14 = sst [smem:[#allocation2]] %s8
  $region1: #{tpu_custom_call.1} parent=0
    #allocation3 [shape = 'u8[65536]{0}', space=vmem, size = 0x10000, scoped, tag = 'input window, operand 1, single buffered']
    #allocation4 [shape = 's32[1]{0}', space=sflag, size = 0x4, scoped, tag = 'scoped memory for tpu_custom_call.1']
    #allocation5 [shape = 'u8[512]{0}', space=vmem, size = 0x400, scoped, tag = 'input window, operand 2, single buffered']
    #allocation6 [shape = 's32[1]{0}', space=sflag, size = 0x4, scoped, tag = 'scoped memory for tpu_custom_call.1']
    #allocation7 [shape = 'u8[32768]{0}', space=vmem, size = 0x8000, scoped, tag = 'input window, operand 5, single buffered']
    #allocation8 [shape = 'u8[65536]{0}', space=vmem, size = 0x10000, scoped, tag = 'output window, operand 0, single buffered']
    %15 = vsyncpa [#allocation4], 0
    %16 = vsyncpa [#allocation6], 0
    // Predicated region
    $region2: #{tpu_custom_call.1} parent=1 // pred_check
      _
    $region3: #{tpu_custom_call.1} parent=1 // pred_check_branch
      %18 = sbr.rel (0) target = $region5
    $region4: #{tpu_custom_call.1} parent=1 // pred_region
      _
    $region5: #{tpu_custom_call.1} parent=1 // pred_fallthru
      _
    // Predicated region
    $region6: #{tpu_custom_call.1} parent=1 // pred_check
      _
    $region7: #{tpu_custom_call.1} parent=1 // pred_check_branch
      %20 = sbr.rel (0) target = $region9
    $region8: #{tpu_custom_call.1} parent=1 // pred_region
      %s22 = ssub.s32 2048, 2048
      %23 = vsyncadd [#allocation4], %s22
      %s24 = sshll.u32 [#allocation3], 4
      %s25 = int_to_ptr.vmem [resolvable:$true] %s24
      %30 = dma.hbm_to_vmem [thread:$0]  %s1, 2048, %s25, [#allocation4], 64, 64, 4
    $region9: #{tpu_custom_call.1} parent=1 // pred_fallthru
      _
    // Predicated region
    $region10: #{tpu_custom_call.1} parent=1 // pred_check
      _
    $region11: #{tpu_custom_call.1} parent=1 // pred_check_branch
      %32 = sbr.rel (0) target = $region13
    $region12: #{tpu_custom_call.1} parent=1 // pred_region
      %s34 = ssub.s32 16, 16
      %35 = vsyncadd [#allocation6], %s34
      %s37 = sshll.u32 [#allocation5], 4
      %s38 = int_to_ptr.vmem [resolvable:$true] %s37
      %40 = dma.hbm_to_vmem [thread:$0]  %s2, 16, %s38, [#allocation6]
    $region13: #{tpu_custom_call.1} parent=1 // pred_fallthru
      _
    // Predicated region
    $region14: #{tpu_custom_call.1} parent=1 // pred_check
      _
    $region15: #{tpu_custom_call.1} parent=1 // pred_check_branch
      %42 = sbr.rel (0) target = $region17
    $region16: #{tpu_custom_call.1} parent=1 // pred_region
      _
    $region17: #{tpu_custom_call.1} parent=1 // pred_fallthru
      _
    // Predicated region
    $region18: #{tpu_custom_call.1} parent=1 // pred_check
      _
    $region19: #{tpu_custom_call.1} parent=1 // pred_check_branch
      %44 = sbr.rel (0) target = $region21
    $region20: #{tpu_custom_call.1} parent=1 // pred_region
      _
    $region21: #{tpu_custom_call.1} parent=1 // pred_fallthru
      _
    // Predicated region
    $region22: #{tpu_custom_call.1} parent=1 // pred_check
      _
    $region23: #{tpu_custom_call.1} parent=1 // pred_check_branch
      %46 = sbr.rel (0) target = $region25
    $region24: #{tpu_custom_call.1} parent=1 // pred_region
      %s48 = ssub.s32 1024, 1024
      %49 = vsyncadd [#allocation6], %s48
      %s50 = sshll.u32 [#allocation7], 4
      %s51 = int_to_ptr.vmem [resolvable:$true] %s50
      %56 = dma.hbm_to_vmem [thread:$0]  %s5, 1024, %s51, [#allocation6], 64, 64, 4
    $region25: #{tpu_custom_call.1} parent=1 // pred_fallthru
      _
    // Predicated region
    $region26: #{tpu_custom_call.1} parent=1 // pred_check
      _
    $region27: #{tpu_custom_call.1} parent=1 // pred_check_branch
      %58 = sbr.rel (0) target = $region29
    $region28: #{tpu_custom_call.1} parent=1 // pred_region
      _
    $region29: #{tpu_custom_call.1} parent=1 // pred_fallthru
      _
    // Predicated region
    $region30: #{tpu_custom_call.1} parent=1 // pred_check
      _
    $region31: #{tpu_custom_call.1} parent=1 // pred_check_branch
      %60 = sbr.rel (0) target = $region33
    $region32: #{tpu_custom_call.1} parent=1 // pred_region
      _
    $region33: #{tpu_custom_call.1} parent=1 // pred_fallthru
      _
    // Predicated region
    $region34: #{tpu_custom_call.1} parent=1 // pred_check
      _
    $region35: #{tpu_custom_call.1} parent=1 // pred_check_branch
      %62 = sbr.rel (0) target = $region37
    $region36: #{tpu_custom_call.1} parent=1 // pred_region
      _
    $region37: #{tpu_custom_call.1} parent=1 // pred_fallthru
      _
    // Predicated region
    $region38: #{tpu_custom_call.1} parent=1 // pred_check
      _
    $region39: #{tpu_custom_call.1} parent=1 // pred_check_branch
      %64 = sbr.rel (0) target = $region41
    $region40: #{tpu_custom_call.1} parent=1 // pred_region
      %65 = dma.done [#allocation4], 2048
    $region41: #{tpu_custom_call.1} parent=1 // pred_fallthru
      _
    // Predicated region
    $region42: #{tpu_custom_call.1} parent=1 // pred_check
      _
    $region43: #{tpu_custom_call.1} parent=1 // pred_check_branch
      %67 = sbr.rel (0) target = $region45
    $region44: #{tpu_custom_call.1} parent=1 // pred_region
      %68 = dma.done [#allocation6], 16
    $region45: #{tpu_custom_call.1} parent=1 // pred_fallthru
      _
    // Predicated region
    $region46: #{tpu_custom_call.1} parent=1 // pred_check
      _
    $region47: #{tpu_custom_call.1} parent=1 // pred_check_branch
      %70 = sbr.rel (0) target = $region49
    $region48: #{tpu_custom_call.1} parent=1 // pred_region
      %71 = dma.done [#allocation6], 1024
    $region49: #{tpu_custom_call.1} parent=1 // pred_fallthru
      _
    %v73 = vld [vmem:[%s0] sm:$0xff]
    %v74 = vld [vmem:[%s0 + $0x8] sm:$0xff]
    %v75 = vld [vmem:[%s0 + $0x10] sm:$0xff]
    %v76 = vld [vmem:[%s0 + $0x18] sm:$0xff]
    %v77 = vld [vmem:[%s0 + $0x20] sm:$0xff]
    %v78 = vld [vmem:[%s0 + $0x28] sm:$0xff]
    %v79 = vld [vmem:[%s0 + $0x30] sm:$0xff]
    %v80 = vld [vmem:[%s0 + $0x38] sm:$0xff]
    %v81 = vld [vmem:[%s0 + $0x40] sm:$0xff]
    %v82 = vld [vmem:[%s0 + $0x48] sm:$0xff]
    %v83 = vld [vmem:[%s0 + $0x50] sm:$0xff]
    %v84 = vld [vmem:[%s0 + $0x58] sm:$0xff]
    %v85 = vld [vmem:[%s0 + $0x60] sm:$0xff]
    %v86 = vld [vmem:[%s0 + $0x68] sm:$0xff]
    %v87 = vld [vmem:[%s0 + $0x70] sm:$0xff]
    %v88 = vld [vmem:[%s0 + $0x78] sm:$0xff]
    %v89 = vld [vmem:[%s0 + $0x80] sm:$0xff]
    %v90 = vld [vmem:[%s0 + $0x88] sm:$0xff]
    %v91 = vld [vmem:[%s0 + $0x90] sm:$0xff]
    %v92 = vld [vmem:[%s0 + $0x98] sm:$0xff]
    %v93 = vld [vmem:[%s0 + $0xa0] sm:$0xff]
    %v94 = vld [vmem:[%s0 + $0xa8] sm:$0xff]
    %v95 = vld [vmem:[%s0 + $0xb0] sm:$0xff]
    %v96 = vld [vmem:[%s0 + $0xb8] sm:$0xff]
    %v97 = vld [vmem:[%s0 + $0xc0] sm:$0xff]
    %v98 = vld [vmem:[%s0 + $0xc8] sm:$0xff]
    %v99 = vld [vmem:[%s0 + $0xd0] sm:$0xff]
    %v100 = vld [vmem:[%s0 + $0xd8] sm:$0xff]
    %v101 = vld [vmem:[%s0 + $0xe0] sm:$0xff]
    %v102 = vld [vmem:[%s0 + $0xe8] sm:$0xff]
    %v103 = vld [vmem:[%s0 + $0xf0] sm:$0xff]
    %v104 = vld [vmem:[%s0 + $0xf8] sm:$0xff]
    %v105 = vpack.c.bf16 %v75, %v73
    %v106 = vpack.c.bf16 %v76, %v74
    %v107 = vpack.c.bf16 %v79, %v77
    %v108 = vpack.c.bf16 %v80, %v78
    %v109 = vpack.c.bf16 %v83, %v81
    %v110 = vpack.c.bf16 %v84, %v82
    %v111 = vpack.c.bf16 %v87, %v85
    %v112 = vpack.c.bf16 %v88, %v86
    %v113 = vpack.c.bf16 %v91, %v89
    %v114 = vpack.c.bf16 %v92, %v90
    %v115 = vpack.c.bf16 %v95, %v93
    %v116 = vpack.c.bf16 %v96, %v94
    %v117 = vpack.c.bf16 %v99, %v97
    %v118 = vpack.c.bf16 %v100, %v98
    %v119 = vpack.c.bf16 %v103, %v101
    %v120 = vpack.c.bf16 %v104, %v102
    %v121 = vld [vmem:[#allocation3] sm:$0xf]
    %v122 = vld [vmem:[#allocation3 + $0x4] sm:$0xf]
    %v123 = vld [vmem:[#allocation3 + $0x8] sm:$0xf]
    %v124 = vld [vmem:[#allocation3 + $0xc] sm:$0xf]
    %v125 = vld [vmem:[#allocation3 + $0x10] sm:$0xf]
    %v126 = vld [vmem:[#allocation3 + $0x14] sm:$0xf]
    %v127 = vld [vmem:[#allocation3 + $0x18] sm:$0xf]
    %v128 = vld [vmem:[#allocation3 + $0x1c] sm:$0xf]
    %v129 = vld [vmem:[#allocation3 + $0x20] sm:$0xf]
    %v130 = vld [vmem:[#allocation3 + $0x24] sm:$0xf]
    %v131 = vld [vmem:[#allocation3 + $0x28] sm:$0xf]
    %v132 = vld [vmem:[#allocation3 + $0x2c] sm:$0xf]
    %v133 = vld [vmem:[#allocation3 + $0x30] sm:$0xf]
    %v134 = vld [vmem:[#allocation3 + $0x34] sm:$0xf]
    %v135 = vld [vmem:[#allocation3 + $0x38] sm:$0xf]
    %v136 = vld [vmem:[#allocation3 + $0x3c] sm:$0xf]
    %v137 = vld [vmem:[#allocation3 + $0x40] sm:$0xf]
    %v138 = vld [vmem:[#allocation3 + $0x44] sm:$0xf]
    %v139 = vld [vmem:[#allocation3 + $0x48] sm:$0xf]
    %v140 = vld [vmem:[#allocation3 + $0x4c] sm:$0xf]
    %v141 = vld [vmem:[#allocation3 + $0x50] sm:$0xf]
    %v142 = vld [vmem:[#allocation3 + $0x54] sm:$0xf]
    %v143 = vld [vmem:[#allocation3 + $0x58] sm:$0xf]
    %v144 = vld [vmem:[#allocation3 + $0x5c] sm:$0xf]
    %v145 = vld [vmem:[#allocation3 + $0x60] sm:$0xf]
    %v146 = vld [vmem:[#allocation3 + $0x64] sm:$0xf]
    %v147 = vld [vmem:[#allocation3 + $0x68] sm:$0xf]
    %v148 = vld [vmem:[#allocation3 + $0x6c] sm:$0xf]
    %v149 = vld [vmem:[#allocation3 + $0x70] sm:$0xf]
    %v150 = vld [vmem:[#allocation3 + $0x74] sm:$0xf]
    %v151 = vld [vmem:[#allocation3 + $0x78] sm:$0xf]
    %v152 = vld [vmem:[#allocation3 + $0x7c] sm:$0xf]
    %v153 = vld [vmem:[#allocation5] sm:$0x1]
    %v155 = vlaneseq
    %v156 = vshrl.u32 %v155, 7
    %v157 = vsub.s32 0, %v156
    %v158 = vrot.slane %v153, %v157
    %v192 = vunpack.c.l.b16 %v121
    %v193 = vunpack.c.l.b16 %v122
    %v194 = vunpack.c.l.b16 %v123
    %v195 = vunpack.c.l.b16 %v124
    %v196 = vunpack.c.l.b16 %v125
    %v197 = vunpack.c.l.b16 %v126
    %v198 = vunpack.c.l.b16 %v127
    %v199 = vunpack.c.l.b16 %v128
    %v200 = vunpack.c.l.b16 %v129
    %v201 = vunpack.c.l.b16 %v130
    %v202 = vunpack.c.l.b16 %v131
    %v203 = vunpack.c.l.b16 %v132
    %v204 = vunpack.c.l.b16 %v133
    %v205 = vunpack.c.l.b16 %v134
    %v206 = vunpack.c.l.b16 %v135
    %v207 = vunpack.c.l.b16 %v136
    %v208 = vunpack.c.l.b16 %v137
    %v209 = vunpack.c.l.b16 %v138
    %v210 = vunpack.c.l.b16 %v139
    %v211 = vunpack.c.l.b16 %v140
    %v212 = vunpack.c.l.b16 %v141
    %v213 = vunpack.c.l.b16 %v142
    %v214 = vunpack.c.l.b16 %v143
    %v215 = vunpack.c.l.b16 %v144
    %v216 = vunpack.c.l.b16 %v145
    %v217 = vunpack.c.l.b16 %v146
    %v218 = vunpack.c.l.b16 %v147
    %v219 = vunpack.c.l.b16 %v148
    %v220 = vunpack.c.l.b16 %v149
    %v221 = vunpack.c.l.b16 %v150
    %v222 = vunpack.c.l.b16 %v151
    %v223 = vunpack.c.l.b16 %v152
    %v224 = vpack.c.b16 %v193, %v192
    %v225 = vpack.c.b16 %v195, %v194
    %v226 = vpack.c.b16 %v197, %v196
    %v227 = vpack.c.b16 %v199, %v198
    %v228 = vpack.c.b16 %v201, %v200
    %v229 = vpack.c.b16 %v203, %v202
    %v230 = vpack.c.b16 %v205, %v204
    %v231 = vpack.c.b16 %v207, %v206
    %v232 = vpack.c.b16 %v209, %v208
    %v233 = vpack.c.b16 %v211, %v210
    %v234 = vpack.c.b16 %v213, %v212
    %v235 = vpack.c.b16 %v215, %v214
    %v236 = vpack.c.b16 %v217, %v216
    %v237 = vpack.c.b16 %v219, %v218
    %v238 = vpack.c.b16 %v221, %v220
    %v239 = vpack.c.b16 %v223, %v222
    %256 = vmatprep.subr.bf16.mxu0 0
    %257 = vmatpush1.bf16.msra.mxu0 %v224
    %258 = vmatprep.subr.bf16.mxu0 0
    %259 = vmatpush1.bf16.msra.mxu0 %v225
    %260 = vmatprep.subr.bf16.mxu0 0
    %261 = vmatpush1.bf16.msra.mxu0 %v226
    %262 = vmatprep.subr.bf16.mxu0 0
    %263 = vmatpush1.bf16.msra.mxu0 %v227
    %264 = vmatprep.subr.bf16.mxu0 0
    %265 = vmatpush1.bf16.msra.mxu0 %v228
    %266 = vmatprep.subr.bf16.mxu0 0
    %267 = vmatpush1.bf16.msra.mxu0 %v229
    %268 = vmatprep.subr.bf16.mxu0 0
    %269 = vmatpush1.bf16.msra.mxu0 %v230
    %270 = vmatprep.subr.bf16.mxu0 0
    %271 = vmatpush1.bf16.msra.mxu0 %v231
    %272 = vmatprep.subr.bf16.mxu0 0
    %273 = vmatpush1.bf16.msra.mxu0 %v232
    %274 = vmatprep.subr.bf16.mxu0 0
    %275 = vmatpush1.bf16.msra.mxu0 %v233
    %276 = vmatprep.subr.bf16.mxu0 0
    %277 = vmatpush1.bf16.msra.mxu0 %v234
    %278 = vmatprep.subr.bf16.mxu0 0
    %279 = vmatpush1.bf16.msra.mxu0 %v235
    %280 = vmatprep.subr.bf16.mxu0 0
    %281 = vmatpush1.bf16.msra.mxu0 %v236
    %282 = vmatprep.subr.bf16.mxu0 0
    %283 = vmatpush1.bf16.msra.mxu0 %v237
    %284 = vmatprep.subr.bf16.mxu0 0
    %285 = vmatpush1.bf16.msra.mxu0 %v238
    %286 = vmatprep.subr.bf16.mxu0 0
    %287 = vmatpush1.bf16.msra.mxu0 %v239
    %288 = vmatprep.mubr.bf16.mxu0 %v106
    %289 = vmatmul.mubr.bf16.gmra.mrb[0].mxu0 %v105
    %v290 = vpop.f32.mrb[0].mxu0
    %v291 = vadd.f32 %v158, %v290
    %v292 = vpop.f32.mrb[0].mxu0
    %v293 = vpop.f32.mrb[0].mxu0
    %v294 = vadd.f32 %v158, %v293
    %v295 = vpop.f32.mrb[0].mxu0
    %296 = vmatprep.mubr.bf16.mxu0 %v108
    %297 = vmatmul.mubr.bf16.gmra.mrb[0].mxu0 %v107
    %v298 = vpop.f32.mrb[0].mxu0
    %v299 = vadd.f32 %v158, %v298
    %v300 = vpop.f32.mrb[0].mxu0
    %v301 = vpop.f32.mrb[0].mxu0
    %v302 = vadd.f32 %v158, %v301
    %v303 = vpop.f32.mrb[0].mxu0
    %304 = vmatprep.mubr.bf16.mxu0 %v110
    %305 = vmatmul.mubr.bf16.gmra.mrb[0].mxu0 %v109
    %v306 = vpop.f32.mrb[0].mxu0
    %v307 = vadd.f32 %v158, %v306
    %v308 = vpop.f32.mrb[0].mxu0
    %v309 = vpop.f32.mrb[0].mxu0
    %v310 = vadd.f32 %v158, %v309
    %v311 = vpop.f32.mrb[0].mxu0
    %312 = vmatprep.mubr.bf16.mxu0 %v112
    %313 = vmatmul.mubr.bf16.gmra.mrb[0].mxu0 %v111
    %v314 = vpop.f32.mrb[0].mxu0
    %v315 = vadd.f32 %v158, %v314
    %v316 = vpop.f32.mrb[0].mxu0
    %v317 = vpop.f32.mrb[0].mxu0
    %v318 = vadd.f32 %v158, %v317
    %v319 = vpop.f32.mrb[0].mxu0
    %320 = vmatprep.mubr.bf16.mxu0 %v114
    %321 = vmatmul.mubr.bf16.gmra.mrb[0].mxu0 %v113
    %v322 = vpop.f32.mrb[0].mxu0
    %v323 = vadd.f32 %v158, %v322
    %v324 = vpop.f32.mrb[0].mxu0
    %v325 = vpop.f32.mrb[0].mxu0
    %v326 = vadd.f32 %v158, %v325
    %v327 = vpop.f32.mrb[0].mxu0
    %328 = vmatprep.mubr.bf16.mxu0 %v116
    %329 = vmatmul.mubr.bf16.gmra.mrb[0].mxu0 %v115
    %v330 = vpop.f32.mrb[0].mxu0
    %v331 = vadd.f32 %v158, %v330
    %v332 = vpop.f32.mrb[0].mxu0
    %v333 = vpop.f32.mrb[0].mxu0
    %v334 = vadd.f32 %v158, %v333
    %v335 = vpop.f32.mrb[0].mxu0
    %336 = vmatprep.mubr.bf16.mxu0 %v118
    %337 = vmatmul.mubr.bf16.gmra.mrb[0].mxu0 %v117
    %v338 = vpop.f32.mrb[0].mxu0
    %v339 = vadd.f32 %v158, %v338
    %v340 = vpop.f32.mrb[0].mxu0
    %v341 = vpop.f32.mrb[0].mxu0
    %v342 = vadd.f32 %v158, %v341
    %v343 = vpop.f32.mrb[0].mxu0
    %344 = vmatprep.mubr.bf16.mxu0 %v120
    %345 = vmatmul.mubr.bf16.gmra.mrb[0].mxu0 %v119
    %v346 = vpop.f32.mrb[0].mxu0
    %v347 = vadd.f32 %v158, %v346
    %v348 = vpop.f32.mrb[0].mxu0
    %v349 = vpop.f32.mrb[0].mxu0
    %v350 = vadd.f32 %v158, %v349
    %v351 = vpop.f32.mrb[0].mxu0
    %352 = vdwg.mxu0
    %v353 = vmax.f32 %v291, 0.0
    %v354 = vmax.f32 %v294, 0.0
    %v355 = vmax.f32 %v299, 0.0
    %v356 = vmax.f32 %v302, 0.0
    %v357 = vmax.f32 %v307, 0.0
    %v358 = vmax.f32 %v310, 0.0
    %v359 = vmax.f32 %v315, 0.0
    %v360 = vmax.f32 %v318, 0.0
    %v361 = vmax.f32 %v323, 0.0
    %v362 = vmax.f32 %v326, 0.0
    %v363 = vmax.f32 %v331, 0.0
    %v364 = vmax.f32 %v334, 0.0
    %v365 = vmax.f32 %v339, 0.0
    %v366 = vmax.f32 %v342, 0.0
    %v367 = vmax.f32 %v347, 0.0
    %v368 = vmax.f32 %v350, 0.0
    %v369 = vpack.c.bf16 %v354, %v353
    %v370 = vpack.c.bf16 %v356, %v355
    %v371 = vpack.c.bf16 %v358, %v357
    %v372 = vpack.c.bf16 %v360, %v359
    %v373 = vpack.c.bf16 %v362, %v361
    %v374 = vpack.c.bf16 %v364, %v363
    %v375 = vpack.c.bf16 %v366, %v365
    %v376 = vpack.c.bf16 %v368, %v367
    %v377 = vld [vmem:[%s3] sm:$0xf]
    %v378 = vld [vmem:[%s3 + $0x4] sm:$0xf]
    %v379 = vld [vmem:[%s3 + $0x8] sm:$0xf]
    %v380 = vld [vmem:[%s3 + $0xc] sm:$0xf]
    %v381 = vld [vmem:[%s3 + $0x10] sm:$0xf]
    %v382 = vld [vmem:[%s3 + $0x14] sm:$0xf]
    %v383 = vld [vmem:[%s3 + $0x18] sm:$0xf]
    %v384 = vld [vmem:[%s3 + $0x1c] sm:$0xf]
    %v385 = vld [vmem:[%s3 + $0x20] sm:$0xf]
    %v386 = vld [vmem:[%s3 + $0x24] sm:$0xf]
    %v387 = vld [vmem:[%s3 + $0x28] sm:$0xf]
    %v388 = vld [vmem:[%s3 + $0x2c] sm:$0xf]
    %v389 = vld [vmem:[%s3 + $0x30] sm:$0xf]
    %v390 = vld [vmem:[%s3 + $0x34] sm:$0xf]
    %v391 = vld [vmem:[%s3 + $0x38] sm:$0xf]
    %v392 = vld [vmem:[%s3 + $0x3c] sm:$0xf]
    %v393 = vld [vmem:[%s4] sm:$0x1]
    %v395 = vlaneseq
    %v396 = vshrl.u32 %v395, 7
    %v397 = vsub.s32 0, %v396
    %v398 = vrot.slane %v393, %v397
    %v416 = vunpack.c.l.b16 %v377
    %v417 = vunpack.c.l.b16 %v378
    %v418 = vunpack.c.l.b16 %v379
    %v419 = vunpack.c.l.b16 %v380
    %v420 = vunpack.c.l.b16 %v381
    %v421 = vunpack.c.l.b16 %v382
    %v422 = vunpack.c.l.b16 %v383
    %v423 = vunpack.c.l.b16 %v384
    %v424 = vunpack.c.l.b16 %v385
    %v425 = vunpack.c.l.b16 %v386
    %v426 = vunpack.c.l.b16 %v387
    %v427 = vunpack.c.l.b16 %v388
    %v428 = vunpack.c.l.b16 %v389
    %v429 = vunpack.c.l.b16 %v390
    %v430 = vunpack.c.l.b16 %v391
    %v431 = vunpack.c.l.b16 %v392
    %v432 = vpack.c.b16 %v417, %v416
    %v433 = vpack.c.b16 %v419, %v418
    %v434 = vpack.c.b16 %v421, %v420
    %v435 = vpack.c.b16 %v423, %v422
    %v436 = vpack.c.b16 %v425, %v424
    %v437 = vpack.c.b16 %v427, %v426
    %v438 = vpack.c.b16 %v429, %v428
    %v439 = vpack.c.b16 %v431, %v430
    %448 = vmatprep.subr.bf16.mxu0 0
    %449 = vmatpush1.bf16.msra.mxu0 %v432
    %450 = vmatprep.subr.bf16.mxu0 0
    %451 = vmatpush1.bf16.msra.mxu0 %v433
    %452 = vmatprep.subr.bf16.mxu0 0
    %453 = vmatpush1.bf16.msra.mxu0 %v434
    %454 = vmatprep.subr.bf16.mxu0 0
    %455 = vmatpush1.bf16.msra.mxu0 %v435
    %456 = vmatprep.subr.bf16.mxu0 0
    %457 = vmatpush1.bf16.msra.mxu0 %v436
    %458 = vmatprep.subr.bf16.mxu0 0
    %459 = vmatpush1.bf16.msra.mxu0 %v437
    %460 = vmatprep.subr.bf16.mxu0 0
    %461 = vmatpush1.bf16.msra.mxu0 %v438
    %462 = vmatprep.subr.bf16.mxu0 0
    %463 = vmatpush1.bf16.msra.mxu0 %v439
    %464 = vmatprep.subr.bf16.mxu0 0
    %465 = vmatpush1.bf16.msra.mxu0 0
    %466 = vmatprep.subr.bf16.mxu0 0
    %467 = vmatpush1.bf16.msra.mxu0 0
    %468 = vmatprep.subr.bf16.mxu0 0
    %469 = vmatpush1.bf16.msra.mxu0 0
    %470 = vmatprep.subr.bf16.mxu0 0
    %471 = vmatpush1.bf16.msra.mxu0 0
    %472 = vmatprep.subr.bf16.mxu0 0
    %473 = vmatpush1.bf16.msra.mxu0 0
    %474 = vmatprep.subr.bf16.mxu0 0
    %475 = vmatpush1.bf16.msra.mxu0 0
    %476 = vmatprep.subr.bf16.mxu0 0
    %477 = vmatpush1.bf16.msra.mxu0 0
    %478 = vmatprep.subr.bf16.mxu0 0
    %479 = vmatpush1.bf16.msra.mxu0 0
    %480 = vmatprep.mubr.bf16.mxu0 0
    %481 = vmatmul.mubr.bf16.gmra.mrb[0].mxu0 %v369
    %v482 = vpop.f32.mrb[0].mxu0
    %v483 = vadd.f32 %v398, %v482
    %v484 = vpop.f32.mrb[0].mxu0
    %v485 = vpop.f32.mrb[0].mxu0
    %v486 = vadd.f32 %v398, %v485
    %v487 = vpop.f32.mrb[0].mxu0
    %488 = vmatprep.mubr.bf16.mxu0 0
    %489 = vmatmul.mubr.bf16.gmra.mrb[0].mxu0 %v370
    %v490 = vpop.f32.mrb[0].mxu0
    %v491 = vadd.f32 %v398, %v490
    %v492 = vpop.f32.mrb[0].mxu0
    %v493 = vpop.f32.mrb[0].mxu0
    %v494 = vadd.f32 %v398, %v493
    %v495 = vpop.f32.mrb[0].mxu0
    %496 = vmatprep.mubr.bf16.mxu0 0
    %497 = vmatmul.mubr.bf16.gmra.mrb[0].mxu0 %v371
    %v498 = vpop.f32.mrb[0].mxu0
    %v499 = vadd.f32 %v398, %v498
    %v500 = vpop.f32.mrb[0].mxu0
    %v501 = vpop.f32.mrb[0].mxu0
    %v502 = vadd.f32 %v398, %v501
    %v503 = vpop.f32.mrb[0].mxu0
    %504 = vmatprep.mubr.bf16.mxu0 0
    %505 = vmatmul.mubr.bf16.gmra.mrb[0].mxu0 %v372
    %v506 = vpop.f32.mrb[0].mxu0
    %v507 = vadd.f32 %v398, %v506
    %v508 = vpop.f32.mrb[0].mxu0
    %v509 = vpop.f32.mrb[0].mxu0
    %v510 = vadd.f32 %v398, %v509
    %v511 = vpop.f32.mrb[0].mxu0
    %512 = vmatprep.mubr.bf16.mxu0 0
    %513 = vmatmul.mubr.bf16.gmra.mrb[0].mxu0 %v373
    %v514 = vpop.f32.mrb[0].mxu0
    %v515 = vadd.f32 %v398, %v514
    %v516 = vpop.f32.mrb[0].mxu0
    %v517 = vpop.f32.mrb[0].mxu0
    %v518 = vadd.f32 %v398, %v517
    %v519 = vpop.f32.mrb[0].mxu0
    %520 = vmatprep.mubr.bf16.mxu0 0
    %521 = vmatmul.mubr.bf16.gmra.mrb[0].mxu0 %v374
    %v522 = vpop.f32.mrb[0].mxu0
    %v523 = vadd.f32 %v398, %v522
    %v524 = vpop.f32.mrb[0].mxu0
    %v525 = vpop.f32.mrb[0].mxu0
    %v526 = vadd.f32 %v398, %v525
    %v527 = vpop.f32.mrb[0].mxu0
    %528 = vmatprep.mubr.bf16.mxu0 0
    %529 = vmatmul.mubr.bf16.gmra.mrb[0].mxu0 %v375
    %v530 = vpop.f32.mrb[0].mxu0
    %v531 = vadd.f32 %v398, %v530
    %v532 = vpop.f32.mrb[0].mxu0
    %v533 = vpop.f32.mrb[0].mxu0
    %v534 = vadd.f32 %v398, %v533
    %v535 = vpop.f32.mrb[0].mxu0
    %536 = vmatprep.mubr.bf16.mxu0 0
    %537 = vmatmul.mubr.bf16.gmra.mrb[0].mxu0 %v376
    %v538 = vpop.f32.mrb[0].mxu0
    %v539 = vadd.f32 %v398, %v538
    %v540 = vpop.f32.mrb[0].mxu0
    %v541 = vpop.f32.mrb[0].mxu0
    %v542 = vadd.f32 %v398, %v541
    %v543 = vpop.f32.mrb[0].mxu0
    %544 = vdwg.mxu0
    %v545 = vmax.f32 %v483, 0.0
    %v546 = vmax.f32 %v486, 0.0
    %v547 = vmax.f32 %v491, 0.0
    %v548 = vmax.f32 %v494, 0.0
    %v549 = vmax.f32 %v499, 0.0
    %v550 = vmax.f32 %v502, 0.0
    %v551 = vmax.f32 %v507, 0.0
    %v552 = vmax.f32 %v510, 0.0
    %v553 = vmax.f32 %v515, 0.0
    %v554 = vmax.f32 %v518, 0.0
    %v555 = vmax.f32 %v523, 0.0
    %v556 = vmax.f32 %v526, 0.0
    %v557 = vmax.f32 %v531, 0.0
    %v558 = vmax.f32 %v534, 0.0
    %v559 = vmax.f32 %v539, 0.0
    %v560 = vmax.f32 %v542, 0.0
    %v561 = vpack.c.bf16 %v546, %v545
    %v562 = vpack.c.bf16 %v548, %v547
    %v563 = vpack.c.bf16 %v550, %v549
    %v564 = vpack.c.bf16 %v552, %v551
    %v565 = vpack.c.bf16 %v554, %v553
    %v566 = vpack.c.bf16 %v556, %v555
    %v567 = vpack.c.bf16 %v558, %v557
    %v568 = vpack.c.bf16 %v560, %v559
    %v569 = vld [vmem:[#allocation7] sm:$0xf]
    %v570 = vld [vmem:[#allocation7 + $0x4] sm:$0xf]
    %v571 = vld [vmem:[#allocation7 + $0x8] sm:$0xf]
    %v572 = vld [vmem:[#allocation7 + $0xc] sm:$0xf]
    %v573 = vld [vmem:[#allocation7 + $0x10] sm:$0xf]
    %v574 = vld [vmem:[#allocation7 + $0x14] sm:$0xf]
    %v575 = vld [vmem:[#allocation7 + $0x18] sm:$0xf]
    %v576 = vld [vmem:[#allocation7 + $0x1c] sm:$0xf]
    %v577 = vld [vmem:[#allocation7 + $0x20] sm:$0xf]
    %v578 = vld [vmem:[#allocation7 + $0x24] sm:$0xf]
    %v579 = vld [vmem:[#allocation7 + $0x28] sm:$0xf]
    %v580 = vld [vmem:[#allocation7 + $0x2c] sm:$0xf]
    %v581 = vld [vmem:[#allocation7 + $0x30] sm:$0xf]
    %v582 = vld [vmem:[#allocation7 + $0x34] sm:$0xf]
    %v583 = vld [vmem:[#allocation7 + $0x38] sm:$0xf]
    %v584 = vld [vmem:[#allocation7 + $0x3c] sm:$0xf]
    %v585 = vld [vmem:[%s6] sm:$0x1]
    %v587 = vlaneseq
    %v588 = vshrl.u32 %v587, 7
    %v589 = vsub.s32 0, %v588
    %v590 = vrot.slane %v585, %v589
    %v608 = vunpack.c.l.b16 %v569
    %v609 = vunpack.c.l.b16 %v570
    %v610 = vunpack.c.l.b16 %v571
    %v611 = vunpack.c.l.b16 %v572
    %v612 = vunpack.c.l.b16 %v573
    %v613 = vunpack.c.l.b16 %v574
    %v614 = vunpack.c.l.b16 %v575
    %v615 = vunpack.c.l.b16 %v576
    %v616 = vunpack.c.l.b16 %v577
    %v617 = vunpack.c.l.b16 %v578
    %v618 = vunpack.c.l.b16 %v579
    %v619 = vunpack.c.l.b16 %v580
    %v620 = vunpack.c.l.b16 %v581
    %v621 = vunpack.c.l.b16 %v582
    %v622 = vunpack.c.l.b16 %v583
    %v623 = vunpack.c.l.b16 %v584
    %v624 = vpack.c.b16 %v609, %v608
    %v625 = vpack.c.b16 %v611, %v610
    %v626 = vpack.c.b16 %v613, %v612
    %v627 = vpack.c.b16 %v615, %v614
    %v628 = vpack.c.b16 %v617, %v616
    %v629 = vpack.c.b16 %v619, %v618
    %v630 = vpack.c.b16 %v621, %v620
    %v631 = vpack.c.b16 %v623, %v622
    %640 = vmatprep.subr.bf16.mxu0 0
    %641 = vmatpush1.bf16.msra.mxu0 %v624
    %642 = vmatprep.subr.bf16.mxu0 0
    %643 = vmatpush1.bf16.msra.mxu0 %v625
    %644 = vmatprep.subr.bf16.mxu0 0
    %645 = vmatpush1.bf16.msra.mxu0 %v626
    %646 = vmatprep.subr.bf16.mxu0 0
    %647 = vmatpush1.bf16.msra.mxu0 %v627
    %648 = vmatprep.subr.bf16.mxu0 0
    %649 = vmatpush1.bf16.msra.mxu0 %v628
    %650 = vmatprep.subr.bf16.mxu0 0
    %651 = vmatpush1.bf16.msra.mxu0 %v629
    %652 = vmatprep.subr.bf16.mxu0 0
    %653 = vmatpush1.bf16.msra.mxu0 %v630
    %654 = vmatprep.subr.bf16.mxu0 0
    %655 = vmatpush1.bf16.msra.mxu0 %v631
    %656 = vmatprep.subr.bf16.mxu0 0
    %657 = vmatpush1.bf16.msra.mxu0 0
    %658 = vmatprep.subr.bf16.mxu0 0
    %659 = vmatpush1.bf16.msra.mxu0 0
    %660 = vmatprep.subr.bf16.mxu0 0
    %661 = vmatpush1.bf16.msra.mxu0 0
    %662 = vmatprep.subr.bf16.mxu0 0
    %663 = vmatpush1.bf16.msra.mxu0 0
    %664 = vmatprep.subr.bf16.mxu0 0
    %665 = vmatpush1.bf16.msra.mxu0 0
    %666 = vmatprep.subr.bf16.mxu0 0
    %667 = vmatpush1.bf16.msra.mxu0 0
    %668 = vmatprep.subr.bf16.mxu0 0
    %669 = vmatpush1.bf16.msra.mxu0 0
    %670 = vmatprep.subr.bf16.mxu0 0
    %671 = vmatpush1.bf16.msra.mxu0 0
    %672 = vmatprep.mubr.bf16.mxu0 0
    %673 = vmatmul.mubr.bf16.gmra.mrb[0].mxu0 %v561
    %v674 = vpop.f32.mrb[0].mxu0
    %v675 = vadd.f32 %v590, %v674
    %v676 = vpop.f32.mrb[0].mxu0
    %v677 = vpop.f32.mrb[0].mxu0
    %v678 = vadd.f32 %v590, %v677
    %v679 = vpop.f32.mrb[0].mxu0
    %680 = vmatprep.mubr.bf16.mxu0 0
    %681 = vmatmul.mubr.bf16.gmra.mrb[0].mxu0 %v562
    %v682 = vpop.f32.mrb[0].mxu0
    %v683 = vadd.f32 %v590, %v682
    %v684 = vpop.f32.mrb[0].mxu0
    %v685 = vpop.f32.mrb[0].mxu0
    %v686 = vadd.f32 %v590, %v685
    %v687 = vpop.f32.mrb[0].mxu0
    %688 = vmatprep.mubr.bf16.mxu0 0
    %689 = vmatmul.mubr.bf16.gmra.mrb[0].mxu0 %v563
    %v690 = vpop.f32.mrb[0].mxu0
    %v691 = vadd.f32 %v590, %v690
    %v692 = vpop.f32.mrb[0].mxu0
    %v693 = vpop.f32.mrb[0].mxu0
    %v694 = vadd.f32 %v590, %v693
    %v695 = vpop.f32.mrb[0].mxu0
    %696 = vmatprep.mubr.bf16.mxu0 0
    %697 = vmatmul.mubr.bf16.gmra.mrb[0].mxu0 %v564
    %v698 = vpop.f32.mrb[0].mxu0
    %v699 = vadd.f32 %v590, %v698
    %v700 = vpop.f32.mrb[0].mxu0
    %v701 = vpop.f32.mrb[0].mxu0
    %v702 = vadd.f32 %v590, %v701
    %v703 = vpop.f32.mrb[0].mxu0
    %704 = vmatprep.mubr.bf16.mxu0 0
    %705 = vmatmul.mubr.bf16.gmra.mrb[0].mxu0 %v565
    %v706 = vpop.f32.mrb[0].mxu0
    %v707 = vadd.f32 %v590, %v706
    %v708 = vpop.f32.mrb[0].mxu0
    %v709 = vpop.f32.mrb[0].mxu0
    %v710 = vadd.f32 %v590, %v709
    %v711 = vpop.f32.mrb[0].mxu0
    %712 = vmatprep.mubr.bf16.mxu0 0
    %713 = vmatmul.mubr.bf16.gmra.mrb[0].mxu0 %v566
    %v714 = vpop.f32.mrb[0].mxu0
    %v715 = vadd.f32 %v590, %v714
    %v716 = vpop.f32.mrb[0].mxu0
    %v717 = vpop.f32.mrb[0].mxu0
    %v718 = vadd.f32 %v590, %v717
    %v719 = vpop.f32.mrb[0].mxu0
    %720 = vmatprep.mubr.bf16.mxu0 0
    %721 = vmatmul.mubr.bf16.gmra.mrb[0].mxu0 %v567
    %v722 = vpop.f32.mrb[0].mxu0
    %v723 = vadd.f32 %v590, %v722
    %v724 = vpop.f32.mrb[0].mxu0
    %v725 = vpop.f32.mrb[0].mxu0
    %v726 = vadd.f32 %v590, %v725
    %v727 = vpop.f32.mrb[0].mxu0
    %728 = vmatprep.mubr.bf16.mxu0 0
    %729 = vmatmul.mubr.bf16.gmra.mrb[0].mxu0 %v568
    %v730 = vpop.f32.mrb[0].mxu0
    %v731 = vadd.f32 %v590, %v730
    %v732 = vpop.f32.mrb[0].mxu0
    %v733 = vpop.f32.mrb[0].mxu0
    %v734 = vadd.f32 %v590, %v733
    %v735 = vpop.f32.mrb[0].mxu0
    %736 = vdwg.mxu0
    %v737 = vmax.f32 %v675, 0.0
    %v738 = vmax.f32 %v678, 0.0
    %v739 = vmax.f32 %v683, 0.0
    %v740 = vmax.f32 %v686, 0.0
    %v741 = vmax.f32 %v691, 0.0
    %v742 = vmax.f32 %v694, 0.0
    %v743 = vmax.f32 %v699, 0.0
    %v744 = vmax.f32 %v702, 0.0
    %v745 = vmax.f32 %v707, 0.0
    %v746 = vmax.f32 %v710, 0.0
    %v747 = vmax.f32 %v715, 0.0
    %v748 = vmax.f32 %v718, 0.0
    %v749 = vmax.f32 %v723, 0.0
    %v750 = vmax.f32 %v726, 0.0
    %v751 = vmax.f32 %v731, 0.0
    %v752 = vmax.f32 %v734, 0.0
    %v753 = vpack.c.bf16 %v738, %v737
    %v754 = vpack.c.bf16 %v740, %v739
    %v755 = vpack.c.bf16 %v742, %v741
    %v756 = vpack.c.bf16 %v744, %v743
    %v757 = vpack.c.bf16 %v746, %v745
    %v758 = vpack.c.bf16 %v748, %v747
    %v759 = vpack.c.bf16 %v750, %v749
    %v760 = vpack.c.bf16 %v752, %v751
    %v761 = vld [vmem:[%s7] sm:$0xf]
    %v762 = vld [vmem:[%s7 + $0x4] sm:$0xf]
    %v763 = vld [vmem:[%s7 + $0x8] sm:$0xf]
    %v764 = vld [vmem:[%s7 + $0xc] sm:$0xf]
    %v765 = vld [vmem:[%s7 + $0x10] sm:$0xf]
    %v766 = vld [vmem:[%s7 + $0x14] sm:$0xf]
    %v767 = vld [vmem:[%s7 + $0x18] sm:$0xf]
    %v768 = vld [vmem:[%s7 + $0x1c] sm:$0xf]
    %v769 = vld [vmem:[%s7 + $0x20] sm:$0xf]
    %v770 = vld [vmem:[%s7 + $0x24] sm:$0xf]
    %v771 = vld [vmem:[%s7 + $0x28] sm:$0xf]
    %v772 = vld [vmem:[%s7 + $0x2c] sm:$0xf]
    %v773 = vld [vmem:[%s7 + $0x30] sm:$0xf]
    %v774 = vld [vmem:[%s7 + $0x34] sm:$0xf]
    %v775 = vld [vmem:[%s7 + $0x38] sm:$0xf]
    %v776 = vld [vmem:[%s7 + $0x3c] sm:$0xf]
    %s777 = sld [smem:[#allocation2]]
    %v778 = vstv %s777
    %v795 = vunpack.c.l.b16 %v761
    %v796 = vunpack.c.l.b16 %v762
    %v797 = vunpack.c.l.b16 %v763
    %v798 = vunpack.c.l.b16 %v764
    %v799 = vunpack.c.l.b16 %v765
    %v800 = vunpack.c.l.b16 %v766
    %v801 = vunpack.c.l.b16 %v767
    %v802 = vunpack.c.l.b16 %v768
    %v803 = vunpack.c.l.b16 %v769
    %v804 = vunpack.c.l.b16 %v770
    %v805 = vunpack.c.l.b16 %v771
    %v806 = vunpack.c.l.b16 %v772
    %v807 = vunpack.c.l.b16 %v773
    %v808 = vunpack.c.l.b16 %v774
    %v809 = vunpack.c.l.b16 %v775
    %v810 = vunpack.c.l.b16 %v776
    %v811 = vpack.c.b16 %v796, %v795
    %v812 = vpack.c.b16 %v798, %v797
    %v813 = vpack.c.b16 %v800, %v799
    %v814 = vpack.c.b16 %v802, %v801
    %v815 = vpack.c.b16 %v804, %v803
    %v816 = vpack.c.b16 %v806, %v805
    %v817 = vpack.c.b16 %v808, %v807
    %v818 = vpack.c.b16 %v810, %v809
    %827 = vmatprep.subr.bf16.mxu0 0
    %828 = vmatpush1.bf16.msra.mxu0 %v811
    %829 = vmatprep.subr.bf16.mxu0 0
    %830 = vmatpush1.bf16.msra.mxu0 %v812
    %831 = vmatprep.subr.bf16.mxu0 0
    %832 = vmatpush1.bf16.msra.mxu0 %v813
    %833 = vmatprep.subr.bf16.mxu0 0
    %834 = vmatpush1.bf16.msra.mxu0 %v814
    %835 = vmatprep.subr.bf16.mxu0 0
    %836 = vmatpush1.bf16.msra.mxu0 %v815
    %837 = vmatprep.subr.bf16.mxu0 0
    %838 = vmatpush1.bf16.msra.mxu0 %v816
    %839 = vmatprep.subr.bf16.mxu0 0
    %840 = vmatpush1.bf16.msra.mxu0 %v817
    %841 = vmatprep.subr.bf16.mxu0 0
    %842 = vmatpush1.bf16.msra.mxu0 %v818
    %843 = vmatprep.subr.bf16.mxu0 0
    %844 = vmatpush1.bf16.msra.mxu0 0
    %845 = vmatprep.subr.bf16.mxu0 0
    %846 = vmatpush1.bf16.msra.mxu0 0
    %847 = vmatprep.subr.bf16.mxu0 0
    %848 = vmatpush1.bf16.msra.mxu0 0
    %849 = vmatprep.subr.bf16.mxu0 0
    %850 = vmatpush1.bf16.msra.mxu0 0
    %851 = vmatprep.subr.bf16.mxu0 0
    %852 = vmatpush1.bf16.msra.mxu0 0
    %853 = vmatprep.subr.bf16.mxu0 0
    %854 = vmatpush1.bf16.msra.mxu0 0
    %855 = vmatprep.subr.bf16.mxu0 0
    %856 = vmatpush1.bf16.msra.mxu0 0
    %857 = vmatprep.subr.bf16.mxu0 0
    %858 = vmatpush1.bf16.msra.mxu0 0
    %859 = vmatprep.mubr.bf16.mxu0 0
    %860 = vmatmul.mubr.bf16.gmra.mrb[0].mxu0 %v753
    %v861 = vpop.f32.mrb[0].mxu0
    %v862 = vadd.f32 %v778, %v861
    %v863 = vpop.f32.mrb[0].mxu0
    %v864 = vpop.f32.mrb[0].mxu0
    %v865 = vadd.f32 %v778, %v864
    %v866 = vpop.f32.mrb[0].mxu0
    %867 = vmatprep.mubr.bf16.mxu0 0
    %868 = vmatmul.mubr.bf16.gmra.mrb[0].mxu0 %v754
    %v869 = vpop.f32.mrb[0].mxu0
    %v870 = vadd.f32 %v778, %v869
    %v871 = vpop.f32.mrb[0].mxu0
    %v872 = vpop.f32.mrb[0].mxu0
    %v873 = vadd.f32 %v778, %v872
    %v874 = vpop.f32.mrb[0].mxu0
    %875 = vmatprep.mubr.bf16.mxu0 0
    %876 = vmatmul.mubr.bf16.gmra.mrb[0].mxu0 %v755
    %v877 = vpop.f32.mrb[0].mxu0
    %v878 = vadd.f32 %v778, %v877
    %v879 = vpop.f32.mrb[0].mxu0
    %v880 = vpop.f32.mrb[0].mxu0
    %v881 = vadd.f32 %v778, %v880
    %v882 = vpop.f32.mrb[0].mxu0
    %883 = vmatprep.mubr.bf16.mxu0 0
    %884 = vmatmul.mubr.bf16.gmra.mrb[0].mxu0 %v756
    %v885 = vpop.f32.mrb[0].mxu0
    %v886 = vadd.f32 %v778, %v885
    %v887 = vpop.f32.mrb[0].mxu0
    %v888 = vpop.f32.mrb[0].mxu0
    %v889 = vadd.f32 %v778, %v888
    %v890 = vpop.f32.mrb[0].mxu0
    %891 = vmatprep.mubr.bf16.mxu0 0
    %892 = vmatmul.mubr.bf16.gmra.mrb[0].mxu0 %v757
    %v893 = vpop.f32.mrb[0].mxu0
    %v894 = vadd.f32 %v778, %v893
    %v895 = vpop.f32.mrb[0].mxu0
    %v896 = vpop.f32.mrb[0].mxu0
    %v897 = vadd.f32 %v778, %v896
    %v898 = vpop.f32.mrb[0].mxu0
    %899 = vmatprep.mubr.bf16.mxu0 0
    %900 = vmatmul.mubr.bf16.gmra.mrb[0].mxu0 %v758
    %v901 = vpop.f32.mrb[0].mxu0
    %v902 = vadd.f32 %v778, %v901
    %v903 = vpop.f32.mrb[0].mxu0
    %v904 = vpop.f32.mrb[0].mxu0
    %v905 = vadd.f32 %v778, %v904
    %v906 = vpop.f32.mrb[0].mxu0
    %907 = vmatprep.mubr.bf16.mxu0 0
    %908 = vmatmul.mubr.bf16.gmra.mrb[0].mxu0 %v759
    %v909 = vpop.f32.mrb[0].mxu0
    %v910 = vadd.f32 %v778, %v909
    %v911 = vpop.f32.mrb[0].mxu0
    %v912 = vpop.f32.mrb[0].mxu0
    %v913 = vadd.f32 %v778, %v912
    %v914 = vpop.f32.mrb[0].mxu0
    %915 = vmatprep.mubr.bf16.mxu0 0
    %916 = vmatmul.mubr.bf16.gmra.mrb[0].mxu0 %v760
    %v917 = vpop.f32.mrb[0].mxu0
    %v918 = vadd.f32 %v778, %v917
    %v919 = vpop.f32.mrb[0].mxu0
    %v920 = vpop.f32.mrb[0].mxu0
    %v921 = vadd.f32 %v778, %v920
    %v922 = vpop.f32.mrb[0].mxu0
    %923 = vdwg.mxu0
    %vm924 = vcmask 7168
    %925 = vst.msk [vmem:[#allocation8] sm:$0xff] %vm924, %v862
    %926 = vst.msk [vmem:[#allocation8 + $0x8] sm:$0xff] %vm924, %v865
    %927 = vst.msk [vmem:[#allocation8 + $0x10] sm:$0xff] %vm924, %v870
    %928 = vst.msk [vmem:[#allocation8 + $0x18] sm:$0xff] %vm924, %v873
    %929 = vst.msk [vmem:[#allocation8 + $0x20] sm:$0xff] %vm924, %v878
    %930 = vst.msk [vmem:[#allocation8 + $0x28] sm:$0xff] %vm924, %v881
    %931 = vst.msk [vmem:[#allocation8 + $0x30] sm:$0xff] %vm924, %v886
    %932 = vst.msk [vmem:[#allocation8 + $0x38] sm:$0xff] %vm924, %v889
    %933 = vst.msk [vmem:[#allocation8 + $0x40] sm:$0xff] %vm924, %v894
    %934 = vst.msk [vmem:[#allocation8 + $0x48] sm:$0xff] %vm924, %v897
    %935 = vst.msk [vmem:[#allocation8 + $0x50] sm:$0xff] %vm924, %v902
    %936 = vst.msk [vmem:[#allocation8 + $0x58] sm:$0xff] %vm924, %v905
    %937 = vst.msk [vmem:[#allocation8 + $0x60] sm:$0xff] %vm924, %v910
    %938 = vst.msk [vmem:[#allocation8 + $0x68] sm:$0xff] %vm924, %v913
    %939 = vst.msk [vmem:[#allocation8 + $0x70] sm:$0xff] %vm924, %v918
    %940 = vst.msk [vmem:[#allocation8 + $0x78] sm:$0xff] %vm924, %v921
    // Predicated region
    $region50: #{tpu_custom_call.1} parent=1 // pred_check
      _
    $region51: #{tpu_custom_call.1} parent=1 // pred_check_branch
      %942 = sbr.rel (0) target = $region53
    $region52: #{tpu_custom_call.1} parent=1 // pred_region
      // Predicated region
      $region54: #{tpu_custom_call.1} parent=52 // pred_check
        _
      $region55: #{tpu_custom_call.1} parent=52 // pred_check_branch
        %944 = sbr.rel (0) target = $region57
      $region56: #{tpu_custom_call.1} parent=52 // pred_region
        // Predicated region
        $region58: #{tpu_custom_call.1} parent=56 // pred_check
          _
        $region59: #{tpu_custom_call.1} parent=56 // pred_check_branch
          %946 = sbr.rel (0) target = $region61
        $region60: #{tpu_custom_call.1} parent=56 // pred_region
          // Predicated region
          $region73: #{tpu_custom_call.1} parent=60 // pred_check
            _
          $region74: #{tpu_custom_call.1} parent=60 // pred_check_branch
            %961 = sbr.rel (0) target = $region76
          $region75: #{tpu_custom_call.1} parent=60 // pred_region
            loop: start=0, step=1, limit=1
            $region77: #{tpu_custom_call.1} parent=75 // loop_pre_header
              _
            $region78: #{tpu_custom_call.1} parent=75 // loop_header
              %s963 = sphi 0, %s967
              %p964 = scmp.ge.s32.totalorder %s963, 1
              %s968 = sphi [#allocation8], [#allocation8]
              %s969 = sphi %s9, %s9
            $region79: #{tpu_custom_call.1} parent=75 // loop_header_branch
              %966 = sbr.rel (%p964) target = $region83
            $region80: #{tpu_custom_call.1} parent=75 // loop_body
              %v970 = vld [vmem:[%s968] sm:$0xff]
              %971 = vst [vmem:[%s969] sm:$0xff] %v970
            $region81: #{tpu_custom_call.1} parent=75 // loop_footer
              %s967 = sadd.s32 1, %s963
            $region82: #{tpu_custom_call.1} parent=75 // loop_footer_branch
              %962 = sbr.rel target = $region78
            $region83: #{tpu_custom_call.1} parent=75 // loop_exit
              _
          $region76: #{tpu_custom_call.1} parent=60 // pred_fallthru
            _
          // Predicated region
          $region84: #{tpu_custom_call.1} parent=60 // pred_check
            _
          $region85: #{tpu_custom_call.1} parent=60 // pred_check_branch
            %973 = sbr.rel target = $region87
          $region86: #{tpu_custom_call.1} parent=60 // pred_region
            _
          $region87: #{tpu_custom_call.1} parent=60 // pred_fallthru
            _
        $region61: #{tpu_custom_call.1} parent=56 // pred_fallthru
          _
        // Predicated region
        $region62: #{tpu_custom_call.1} parent=56 // pred_check
          _
        $region63: #{tpu_custom_call.1} parent=56 // pred_check_branch
          %948 = sbr.rel target = $region65
        $region64: #{tpu_custom_call.1} parent=56 // pred_region
          loop: start=0, step=1, limit=1
          $region66: #{tpu_custom_call.1} parent=64 // loop_pre_header
            _
          $region67: #{tpu_custom_call.1} parent=64 // loop_header
            %s951 = sphi 0, %s955
            %p952 = scmp.ge.s32.totalorder %s951, 1
            %s956 = sphi [#allocation8], [#allocation8]
            %s957 = sphi %s9, %s9
          $region68: #{tpu_custom_call.1} parent=64 // loop_header_branch
            %954 = sbr.rel (%p952) target = $region72
          $region69: #{tpu_custom_call.1} parent=64 // loop_body
            %v958 = vld [vmem:[%s956] sm:$0xff]
            %959 = vst [vmem:[%s957] sm:$0xff] %v958
          $region70: #{tpu_custom_call.1} parent=64 // loop_footer
            %s955 = sadd.s32 1, %s951
          $region71: #{tpu_custom_call.1} parent=64 // loop_footer_branch
            %950 = sbr.rel target = $region67
          $region72: #{tpu_custom_call.1} parent=64 // loop_exit
            _
        $region65: #{tpu_custom_call.1} parent=56 // pred_fallthru
          _
      $region57: #{tpu_custom_call.1} parent=52 // pred_fallthru
        _
      %974 = vnop
    $region53: #{tpu_custom_call.1} parent=1 // pred_fallthru
      _
    // Predicated region
    $region88: #{tpu_custom_call.1} parent=1 // pred_check
      _
    $region89: #{tpu_custom_call.1} parent=1 // pred_check_branch
      %976 = sbr.rel (0) target = $region91
    $region90: #{tpu_custom_call.1} parent=1 // pred_region
      _
    $region91: #{tpu_custom_call.1} parent=1 // pred_fallthru
      _
    %977 = vsyncpa [#allocation4], 1
    %978 = vsyncpa [#allocation6], 1

</llo_original>
